<compile_context>
chip_gen: v7x
topology: tpu7x:2x2x1
jax: 0.10.0
libtpu: 0.0.40
codegen_flags: <defaults>
</compile_context>

<pallas_src>
import jax
import jax.numpy as jnp
from jax.experimental import pallas as pl
from jax.experimental.pallas import tpu as pltpu


def _attention_kernel(x_ref, wt_ref, b_ref, v_ref, o_ref):
    # x_ref : [BB, sl, hd]   batch block
    # wt_ref: [hd, dense]    Uq weight, pre-transposed in the wrapper
    # b_ref : [1, dense]     Uq bias
    # v_ref : [1, dense]     vq
    # o_ref : [BB, hd]       output rows for this batch block
    bb, sl, hd = x_ref.shape
    dense = wt_ref.shape[1]

    x = x_ref[...].astype(jnp.float32)            # [bb, sl, hd]
    wt = wt_ref[...].astype(jnp.float32)          # [hd, dense]
    b = b_ref[...].astype(jnp.float32)            # [1, dense]
    v = v_ref[...].astype(jnp.float32)            # [1, dense]

    # One flattened M = bb*sl matmul on the MXU instead of bb tiny M=sl ones.
    key = jnp.tanh(
        jnp.dot(x.reshape(bb * sl, hd), wt, preferred_element_type=jnp.float32) + b
    ).reshape(bb, sl, dense)                      # [bb, sl, dense]

    # score = <key, vq> along dense: broadcast-multiply + lane reduce (VPU/XLU),
    # avoids an in-kernel key.T transpose and a degenerate [1,dense]x[dense,sl]
    # MXU matmul.
    score = jnp.sum(key * v, axis=-1)             # [bb, sl]

    # softmax over the signal-length axis
    m = jnp.max(score, axis=-1, keepdims=True)
    e = jnp.exp(score - m)
    weight = e * pl.reciprocal(jnp.sum(e, axis=-1, keepdims=True), approx=True)

    # res = sum_sl weight * x  (broadcast-multiply + sublane reduce) -> [bb, hd]
    res = jnp.sum(weight[:, :, None] * x, axis=1)
    o_ref[...] = res.astype(o_ref.dtype)


def attention_forward(x, uq_w, uq_b, vq, *, block_bs=None):
    """x: [bs, sl, hd], uq_w: [dense, hd], uq_b: [dense], vq: [1, 1, dense] -> [bs, hd]"""
    bs, sl, hd = x.shape
    dense = uq_w.shape[0]

    # Pre-transpose the Linear weight once outside the kernel -> [hd, dense].
    wt = uq_w.T
    uq_b2 = uq_b.reshape(1, dense)
    vq2 = vq.reshape(1, dense)

    if block_bs is None:
        # Target M = bb*sl ~ 256 rows (multiple of 128 as well, so it suits
        # both the v5e 4x128x128 and v6e/v7x 2x256x256 MXUs), and cap the
        # per-step x slab at ~4 MiB so double buffering stays well inside the
        # scoped VMEM limits on every generation (16 MiB v5e, 32 MiB v6e/v7x,
        # 64 MiB physical on v7x).
        rows_target = 256
        bb = max(1, rows_target // sl)
        bytes_per_batch_row = sl * hd * 4
        max_bb_vmem = max(1, (4 << 20) // max(1, bytes_per_batch_row))
        bb = min(bb, max_bb_vmem, bs)
    else:
        bb = max(1, min(block_bs, bs))

    padded_bs = pl.cdiv(bs, bb) * bb
    if padded_bs != bs:
        # Zero-padded batch rows produce finite garbage that is sliced away.
        x = jnp.pad(x, ((0, padded_bs - bs), (0, 0), (0, 0)))

    grid_spec = pltpu.PrefetchScalarGridSpec(
        num_scalar_prefetch=0,
        grid=(padded_bs // bb,),
        in_specs=[
            pl.BlockSpec((bb, sl, hd), lambda b: (b, 0, 0)),   # x, batch block
            pl.BlockSpec((hd, dense), lambda b: (0, 0)),       # Uq weight^T (replicated)
            pl.BlockSpec((1, dense), lambda b: (0, 0)),        # Uq bias
            pl.BlockSpec((1, dense), lambda b: (0, 0)),        # vq
        ],
        out_specs=pl.BlockSpec((bb, hd), lambda b: (b, 0)),
    )

    out = pl.pallas_call(
        _attention_kernel,
        out_shape=jax.ShapeDtypeStruct((padded_bs, hd), x.dtype),
        grid_spec=grid_spec,
        compiler_params=pltpu.CompilerParams(
            # Batch axis is independent -> megacore / dual-TC sharding on v7x.
            dimension_semantics=("parallel",)
        ),
    )(x, wt, uq_b2, vq2)

    return out[:bs]


def attention_reference(x, uq_w, uq_b, vq):
    """Pure-JAX reference of the PyTorch forward (mask=None)."""
    key = jnp.tanh(jnp.einsum("bsh,dh->bsd", x, uq_w) + uq_b)          # [bs, sl, dense]
    score = jnp.einsum("od,bsd->bos", vq.reshape(1, -1), key)          # [bs, 1, sl]
    weight = jax.nn.softmax(score, axis=-1)                            # [bs, 1, sl]
    res = jnp.einsum("bos,bsh->boh", weight, x).sum(axis=1)            # [bs, hd]
    return res


if __name__ == "__main__":
    # Small shapes consistent with the module: bs=2, signal_length=8,
    # hidden_dim=32, Dense_dim=16.
    bs, sl, hd, dense = 2, 8, 32, 16

    key0 = jax.random.PRNGKey(0)
    kx, kw, kb, kv = jax.random.split(key0, 4)

    x = jax.random.normal(kx, (bs, sl, hd), dtype=jnp.float32)
    uq_w = jax.random.normal(kw, (dense, hd), dtype=jnp.float32) * 0.1   # Linear weight
    uq_b = jax.random.normal(kb, (dense,), dtype=jnp.float32) * 0.1      # Linear bias
    vq = jax.random.normal(kv, (1, 1, dense), dtype=jnp.float32)         # nn.Parameter

    out = attention_forward(x, uq_w, uq_b, vq)
    out = jax.block_until_ready(out)

    ref = attention_reference(x, uq_w, uq_b, vq)
    assert out.shape == (bs, hd), out.shape
    # Tolerance accounts for the approximate EUP reciprocal in the softmax
    # denominator (~1e-3 relative error worst case).
    assert jnp.allclose(out, ref, atol=1e-2, rtol=1e-2), (
        "mismatch vs reference: max abs err "
        f"{float(jnp.max(jnp.abs(out - ref)))}"
    )

    print("KERNEL_OK")
</pallas_src>

<mosaic_0001>
module attributes {stable_mosaic.version = 11 : i64} {
  func.func @_attention_kernel(%arg0: i32, %arg1: memref<2x8x32xf32, #tpu.memory_space<vmem>>, %arg2: memref<32x16xf32, #tpu.memory_space<vmem>>, %arg3: memref<1x16xf32, #tpu.memory_space<vmem>>, %arg4: memref<1x16xf32, #tpu.memory_space<vmem>>, %arg5: memref<2x32xf32, #tpu.memory_space<vmem>>) attributes {dimension_semantics = [#tpu.dimension_semantics<parallel>], iteration_bounds = array<i64: 1>, scalar_prefetch = 0 : i64, scratch_operands = 0 : i64, tpu.core_type = #tpu.core_type<tc>, window_params = [{transform_indices = @transform_0, window_bounds = array<i64: 2, 8, 32>}, {pipeline_mode = #tpu.pipeline_mode<synchronous>, transform_indices = @transform_1, window_bounds = array<i64: 32, 16>}, {pipeline_mode = #tpu.pipeline_mode<synchronous>, transform_indices = @transform_2, window_bounds = array<i64: 1, 16>}, {pipeline_mode = #tpu.pipeline_mode<synchronous>, transform_indices = @transform_3, window_bounds = array<i64: 1, 16>}, {transform_indices = @transform_4, window_bounds = array<i64: 2, 32>}]} {
    %c0 = arith.constant 0 : index
    %c0_0 = arith.constant 0 : index
    %c0_1 = arith.constant 0 : index
    %0 = vector.load %arg1[%c0, %c0_0, %c0_1] : memref<2x8x32xf32, #tpu.memory_space<vmem>>, vector<2x8x32xf32>
    %c0_2 = arith.constant 0 : index
    %c0_3 = arith.constant 0 : index
    %1 = vector.load %arg2[%c0_2, %c0_3] : memref<32x16xf32, #tpu.memory_space<vmem>>, vector<32x16xf32>
    %c0_4 = arith.constant 0 : index
    %c0_5 = arith.constant 0 : index
    %2 = vector.load %arg3[%c0_4, %c0_5] : memref<1x16xf32, #tpu.memory_space<vmem>>, vector<1x16xf32>
    %c0_6 = arith.constant 0 : index
    %c0_7 = arith.constant 0 : index
    %3 = vector.load %arg4[%c0_6, %c0_7] : memref<1x16xf32, #tpu.memory_space<vmem>>, vector<1x16xf32>
    %4 = vector.shape_cast %0 : vector<2x8x32xf32> to vector<16x32xf32>
    %cst = arith.constant dense<0.000000e+00> : vector<16x16xf32>
    %5 = tpu.matmul %4, %1, %cst {dimension_numbers = #tpu.dot_dimension_numbers<[1], [0], [0], [1], [0, 0, 1, 1], [], []>} : vector<16x32xf32>, vector<32x16xf32>, vector<16x16xf32> -> vector<16x16xf32>
    %6 = vector.broadcast %2 : vector<1x16xf32> to vector<16x16xf32>
    %7 = arith.addf %5, %6 : vector<16x16xf32>
    %8 = math.tanh %7 : vector<16x16xf32>
    %9 = vector.shape_cast %8 : vector<16x16xf32> to vector<2x8x16xf32>
    %10 = vector.shape_cast %3 : vector<1x16xf32> to vector<1x1x16xf32>
    %11 = vector.broadcast %10 : vector<1x1x16xf32> to vector<2x8x16xf32>
    %12 = arith.mulf %9, %11 : vector<2x8x16xf32>
    %cst_8 = arith.constant dense<0.000000e+00> : vector<2x8xf32>
    %13 = vector.multi_reduction <add>, %12, %cst_8 [2] : vector<2x8x16xf32> to vector<2x8xf32>
    %cst_9 = arith.constant dense<0xFF800000> : vector<2xf32>
    %14 = vector.multi_reduction <maximumf>, %13, %cst_9 [1] : vector<2x8xf32> to vector<2xf32>
    %15 = vector.shape_cast %14 : vector<2xf32> to vector<2x1xf32>
    %16 = vector.broadcast %15 : vector<2x1xf32> to vector<2x8xf32>
    %17 = arith.subf %13, %16 : vector<2x8xf32>
    %18 = math.exp %17 : vector<2x8xf32>
    %cst_10 = arith.constant dense<0.000000e+00> : vector<2xf32>
    %19 = vector.multi_reduction <add>, %18, %cst_10 [1] : vector<2x8xf32> to vector<2xf32>
    %20 = vector.shape_cast %19 : vector<2xf32> to vector<2x1xf32>
    %21 = tpu.reciprocal %20 {approx = true} : vector<2x1xf32> -> vector<2x1xf32>
    %22 = vector.broadcast %21 : vector<2x1xf32> to vector<2x8xf32>
    %23 = arith.mulf %18, %22 : vector<2x8xf32>
    %24 = vector.shape_cast %23 : vector<2x8xf32> to vector<2x8x1xf32>
    %25 = vector.broadcast %24 : vector<2x8x1xf32> to vector<2x8x32xf32>
    %26 = arith.mulf %25, %0 : vector<2x8x32xf32>
    %cst_11 = arith.constant dense<0.000000e+00> : vector<2x32xf32>
    %27 = vector.multi_reduction <add>, %26, %cst_11 [1] : vector<2x8x32xf32> to vector<2x32xf32>
    %c0_12 = arith.constant 0 : index
    %c0_13 = arith.constant 0 : index
    %28 = vector.load %arg5[%c0_12, %c0_13] : memref<2x32xf32, #tpu.memory_space<vmem>>, vector<2x32xf32>
    tpu.vector_store %arg5[%c0_12, %c0_13], %27 {strides = array<i32>} : memref<2x32xf32, #tpu.memory_space<vmem>>, vector<2x32xf32>,
    return
  }
  func.func @transform_0(%arg0: i32) -> (i32, i32, i32) {
    %c0_i32 = arith.constant 0 : i32
    %c0_i32_0 = arith.constant 0 : i32
    %c0_i32_1 = arith.constant 0 : i32
    return %arg0, %c0_i32, %c0_i32_0 : i32, i32, i32
  }
  func.func @transform_1(%arg0: i32) -> (i32, i32) {
    %c0_i32 = arith.constant 0 : i32
    %c0_i32_0 = arith.constant 0 : i32
    %c0_i32_1 = arith.constant 0 : i32
    return %c0_i32, %c0_i32_0 : i32, i32
  }
  func.func @transform_2(%arg0: i32) -> (i32, i32) {
    %c0_i32 = arith.constant 0 : i32
    %c0_i32_0 = arith.constant 0 : i32
    %c0_i32_1 = arith.constant 0 : i32
    return %c0_i32, %c0_i32_0 : i32, i32
  }
  func.func @transform_3(%arg0: i32) -> (i32, i32) {
    %c0_i32 = arith.constant 0 : i32
    %c0_i32_0 = arith.constant 0 : i32
    %c0_i32_1 = arith.constant 0 : i32
    return %c0_i32, %c0_i32_0 : i32, i32
  }
  func.func @transform_4(%arg0: i32) -> (i32, i32) {
    %c0_i32 = arith.constant 0 : i32
    %c0_i32_0 = arith.constant 0 : i32
    return %arg0, %c0_i32 : i32, i32
  }
}

</mosaic_0001>

<llo_original>
// kernel: tpu_custom_call.1
$region0: #{tpu_custom_call.1}
  #allocation0 [shape = 'u32[]', space=smem, size = 0x4, offset = 0x4, fixed_abs, tag = 'smem constant byte address 0x4 - core index']
  #allocation1 [shape = 'u32[144,128]{1,0:T(1,128)}', space=vmem, size = 0x12000, scoped, tag = 'internal scratch']
  %s0 = inlined_call_operand.vmem [shape: f32[2,8,32], index: 0, kind: input, shape index: {}]
  %s1 = inlined_call_operand.vmem [shape: f32[32,16], index: 1, kind: input, shape index: {}]
  %s2 = inlined_call_operand.vmem [shape: f32[1,16], index: 2, kind: input, shape index: {}]
  %s3 = inlined_call_operand.vmem [shape: f32[1,16], index: 3, kind: input, shape index: {}]
  %s4 = inlined_call_operand.hbm [shape: f32[2,32], index: 4, kind: output, shape index: {}]
  %s5 = sld [smem:[#allocation0]]
  $region26: #{tpu_custom_call.1} parent=0
    _
  %s7 = ssub.s32 1, %s5
  %s8 = scalar_select 0, %s7, %s5
  $region1: #{tpu_custom_call.1} parent=0
    #allocation2 [shape = 'u8[1024]{0}', space=vmem, size = 0x400, scoped, tag = 'output window, operand 0, single buffered']
    #allocation3 [shape = 's32[1]{0}', space=sflag, size = 0x4, scoped, tag = 'scoped memory for tpu_custom_call.1']
    %9 = vsyncpa [#allocation3], 0
    // Predicated region
    $region2: #{tpu_custom_call.1} parent=1 // pred_check
      _
    $region3: #{tpu_custom_call.1} parent=1 // pred_check_branch
      %11 = sbr.rel (0) target = $region5
    $region4: #{tpu_custom_call.1} parent=1 // pred_region
      _
    $region5: #{tpu_custom_call.1} parent=1 // pred_fallthru
      _
    // Predicated region
    $region6: #{tpu_custom_call.1} parent=1 // pred_check
      _
    $region7: #{tpu_custom_call.1} parent=1 // pred_check_branch
      %13 = sbr.rel (0) target = $region9
    $region8: #{tpu_custom_call.1} parent=1 // pred_region
      _
    $region9: #{tpu_custom_call.1} parent=1 // pred_fallthru
      _
    // Predicated region
    $region10: #{tpu_custom_call.1} parent=1 // pred_check
      _
    $region11: #{tpu_custom_call.1} parent=1 // pred_check_branch
      %15 = sbr.rel (0) target = $region13
    $region12: #{tpu_custom_call.1} parent=1 // pred_region
      _
    $region13: #{tpu_custom_call.1} parent=1 // pred_fallthru
      _
    // Predicated region
    $region14: #{tpu_custom_call.1} parent=1 // pred_check
      _
    $region15: #{tpu_custom_call.1} parent=1 // pred_check_branch
      %17 = sbr.rel (0) target = $region17
    $region16: #{tpu_custom_call.1} parent=1 // pred_region
      _
    $region17: #{tpu_custom_call.1} parent=1 // pred_fallthru
      _
    %v18 = vld [vmem:[%s0] sm:$0xff]
    %v19 = vld [vmem:[%s0 + $0x8] sm:$0xff]
    %v20 = vld [vmem:[%s1] sm:$0xff]
    %v21 = vld [vmem:[%s1 + $0x8] sm:$0xff]
    %v22 = vld [vmem:[%s1 + $0x10] sm:$0xff]
    %v23 = vld [vmem:[%s1 + $0x18] sm:$0xff]
    %v24 = vld [vmem:[%s2] sm:$0x1]
    %v25 = vld [vmem:[%s3] sm:$0x1]
    %v27 = vlaneseq
    %v28 = vshrl.u32 %v27, 7
    %v29 = vsub.s32 0, %v28
    %v30 = vrot.slane %v24, %v29
    %vm32 = vcmask 261120
    %v34 = vsel %vm32, %v18, 0
    %v37 = vsel %vm32, %v19, 0
    %39 = vmatprep.subr.mxu0 0.0
    %40 = vmatpush1.msra.mxu0 %v20
    %41 = vmatprep.subr.mxu0 0.0
    %42 = vmatpush1.msra.mxu0 %v21
    %43 = vmatprep.subr.mxu0 0.0
    %44 = vmatpush1.msra.mxu0 %v22
    %45 = vmatprep.subr.mxu0 0.0
    %46 = vmatpush1.msra.mxu0 %v23
    %47 = vmatprep.subr.mxu0 0.0
    %48 = vmatpush1.msra.mxu0 0.0
    %49 = vmatprep.subr.mxu0 0.0
    %50 = vmatpush1.msra.mxu0 0.0
    %51 = vmatprep.subr.mxu0 0.0
    %52 = vmatpush1.msra.mxu0 0.0
    %53 = vmatprep.subr.mxu0 0.0
    %54 = vmatpush1.msra.mxu0 0.0
    %55 = vmatprep.subr.mxu0 0.0
    %56 = vmatpush1.msra.mxu0 0.0
    %57 = vmatprep.subr.mxu0 0.0
    %58 = vmatpush1.msra.mxu0 0.0
    %59 = vmatprep.subr.mxu0 0.0
    %60 = vmatpush1.msra.mxu0 0.0
    %61 = vmatprep.subr.mxu0 0.0
    %62 = vmatpush1.msra.mxu0 0.0
    %63 = vmatprep.subr.mxu0 0.0
    %64 = vmatpush1.msra.mxu0 0.0
    %65 = vmatprep.subr.mxu0 0.0
    %66 = vmatpush1.msra.mxu0 0.0
    %67 = vmatprep.subr.mxu0 0.0
    %68 = vmatpush1.msra.mxu0 0.0
    %69 = vmatprep.subr.mxu0 0.0
    %70 = vmatpush1.msra.mxu0 0.0
    %71 = vmatprep.subr.mxu0 0.0
    %72 = vmatpush1.msra.mxu0 0.0
    %73 = vmatprep.subr.mxu0 0.0
    %74 = vmatpush1.msra.mxu0 0.0
    %75 = vmatprep.subr.mxu0 0.0
    %76 = vmatpush1.msra.mxu0 0.0
    %77 = vmatprep.subr.mxu0 0.0
    %78 = vmatpush1.msra.mxu0 0.0
    %79 = vmatprep.subr.mxu0 0.0
    %80 = vmatpush1.msra.mxu0 0.0
    %81 = vmatprep.subr.mxu0 0.0
    %82 = vmatpush1.msra.mxu0 0.0
    %83 = vmatprep.subr.mxu0 0.0
    %84 = vmatpush1.msra.mxu0 0.0
    %85 = vmatprep.subr.mxu0 0.0
    %86 = vmatpush1.msra.mxu0 0.0
    %87 = vmatprep.subr.mxu0 0.0
    %88 = vmatpush1.msra.mxu0 0.0
    %89 = vmatprep.subr.mxu0 0.0
    %90 = vmatpush1.msra.mxu0 0.0
    %91 = vmatprep.subr.mxu0 0.0
    %92 = vmatpush1.msra.mxu0 0.0
    %93 = vmatprep.subr.mxu0 0.0
    %94 = vmatpush1.msra.mxu0 0.0
    %95 = vmatprep.subr.mxu0 0.0
    %96 = vmatpush1.msra.mxu0 0.0
    %97 = vmatprep.subr.mxu0 0.0
    %98 = vmatpush1.msra.mxu0 0.0
    %99 = vmatprep.subr.mxu0 0.0
    %100 = vmatpush1.msra.mxu0 0.0
    %101 = vmatprep.subr.mxu0 0.0
    %102 = vmatpush1.msra.mxu0 0.0
    %103 = vmatprep.mubr.f32.mxu0 0.0
    %104 = vmatmul.mubr.f32.gmra.mrb[0].mxu0 %v34
    %v105 = vpop.f32.mrb[0].mxu0
    %v106 = vadd.f32 %v30, %v105
    %v107 = vpop.f32.mrb[0].mxu0
    %108 = vmatprep.mubr.f32.mxu0 0.0
    %109 = vmatmul.mubr.f32.gmra.mrb[0].mxu0 %v37
    %v110 = vpop.f32.mrb[0].mxu0
    %v111 = vadd.f32 %v30, %v110
    %v112 = vpop.f32.mrb[0].mxu0
    %113 = vdwg.mxu0
    %v114 = vtanh.pop %v106
    %v115 = vtanh.pop %v111
    %v117 = vlaneseq
    %v118 = vshrl.u32 %v117, 7
    %v119 = vsub.s32 0, %v118
    %v120 = vrot.slane %v25, %v119
    %v122 = vmul.f32 %v114, %v120
    %v123 = vmul.f32 %v115, %v120
    %vm124 = vcmask 130048
    %v125 = vsel %vm124, %v122, 0.0
    %126 = vadd.xlane.f32.xlu0 %v125
    %v127 = vpop.xlane.xlu0 %126
    %v128 = vsel %vm124, %v123, 0.0
    %129 = vadd.xlane.f32.xlu0 %v128
    %v130 = vpop.xlane.xlu0 %129
    %v133 = vlaneseq
    %v134 = vand.u32 %v133, 127
    %v135 = vlaneseq
    %v136 = vshrl.u32 %v135, 7
    %v137 = vsub.s32 %v134, %v136
    %v138 = vrot.slane %v127, %v137
    %v139 = vlaneseq
    %v140 = vshrl.u32 %v139, 7
    %v141 = vsub.s32 %v134, %v140
    %v142 = vrot.slane %v130, %v141
    %vm143 = vcmask 1041409
    %v144 = vsel %vm143, %v142, %v138
    %vm146 = vcmask 58368
    %v147 = vsel %vm146, %v144, -inf
    %148 = vmax.xlane.f32.xlu0 %v147
    %v149 = vpop.xlane.xlu0 %148
    %v151 = vlaneseq
    %v152 = vshrl.u32 %v151, 7
    %v153 = vsub.s32 0, %v152
    %v154 = vrot.slane %v149, %v153
    %v155 = vlaneseq
    %v156 = vshrl.u32 %v155, 7
    %v157 = vsub.s32 1, %v156
    %v158 = vrot.slane %v149, %v157
    %v161 = vsub.f32 %v127, %v154
    %v162 = vsub.f32 %v130, %v158
    %v163 = vmul.f32 %v161, 1.442695
    %v164 = vpow.pop %v163
    %v165 = vmul.f32 %v162, 1.442695
    %v166 = vpow.pop %v165
    %169 = vset.pattern.permute.xlu0 0
    %170 = vperm.xlu0 %169, %v164
    %v171 = vpop.permute.xlu0 %170
    %172 = vset.pattern.permute.xlu0 0
    %173 = vperm.xlu0 %172, %v166
    %v174 = vpop.permute.xlu0 %173
    %v175 = vlaneseq
    %v176 = vshrl.u32 %v175, 7
    %v177 = vsub.s32 %v134, %v176
    %v178 = vrot.slane %v171, %v177
    %v179 = vlaneseq
    %v180 = vshrl.u32 %v179, 7
    %v181 = vsub.s32 %v134, %v180
    %v182 = vrot.slane %v174, %v181
    %v183 = vsel %vm143, %v182, %v178
    %v185 = vsel %vm146, %v183, 0.0
    %186 = vadd.xlane.f32.xlu0 %v185
    %v187 = vpop.xlane.xlu0 %186
    %v188 = vrcp.pop %v187
    %v190 = vlaneseq
    %v191 = vshrl.u32 %v190, 7
    %v192 = vsub.s32 0, %v191
    %v193 = vrot.slane %v188, %v192
    %v194 = vlaneseq
    %v195 = vshrl.u32 %v194, 7
    %v196 = vsub.s32 1, %v195
    %v197 = vrot.slane %v188, %v196
    %v200 = vmul.f32 %v164, %v193
    %v201 = vmul.f32 %v166, %v197
    %203 = vset.pattern.permute.xlu0 0
    %204 = vperm.xlu0 %203, %v200
    %v205 = vpop.permute.xlu0 %204
    %208 = vset.pattern.permute.xlu0 0
    %209 = vperm.xlu0 %208, %v201
    %v210 = vpop.permute.xlu0 %209
    %v212 = vmul.f32 %v205, %v18
    %v213 = vmul.f32 %v210, %v19
    %v214 = vsel %vm32, %v212, 0.0
    %v215 = vrot.slane %v214, 4
    %v216 = vadd.f32 %v214, %v215
    %v217 = vrot.slane %v216, 2
    %v218 = vadd.f32 %v216, %v217
    %v219 = vrot.slane %v218, 1
    %v220 = vadd.f32 %v218, %v219
    %v221 = vsel %vm32, %v213, 0.0
    %v222 = vrot.slane %v221, 4
    %v223 = vadd.f32 %v221, %v222
    %v224 = vrot.slane %v223, 2
    %v225 = vadd.f32 %v223, %v224
    %v226 = vrot.slane %v225, 1
    %v227 = vadd.f32 %v225, %v226
    %v230 = vsel %vm143, %v227, %v220
    %vm232 = vcmask 254976
    %233 = vst.msk [vmem:[#allocation2] sm:$0x3] %vm232, %v230
    // Predicated region
    $region18: #{tpu_custom_call.1} parent=1 // pred_check
      _
    $region19: #{tpu_custom_call.1} parent=1 // pred_check_branch
      %235 = sbr.rel (0) target = $region21
    $region20: #{tpu_custom_call.1} parent=1 // pred_region
      %s237 = ssub.s32 32, 32
      %238 = vsyncadd [#allocation3], %s237
      %s240 = sshll.u32 [#allocation2], 4
      %s241 = int_to_ptr.vmem [resolvable:$true] %s240
      %243 = dma.vmem_to_hbm [thread:$0]  %s241, 32, %s4, [#allocation3]
    $region21: #{tpu_custom_call.1} parent=1 // pred_fallthru
      _
    // Predicated region
    $region22: #{tpu_custom_call.1} parent=1 // pred_check
      _
    $region23: #{tpu_custom_call.1} parent=1 // pred_check_branch
      %245 = sbr.rel (0) target = $region25
    $region24: #{tpu_custom_call.1} parent=1 // pred_region
      %246 = dma.done [#allocation3], 32
    $region25: #{tpu_custom_call.1} parent=1 // pred_fallthru
      _
    %247 = vsyncpa [#allocation3], 1

</llo_original>
